<compile_context>
chip_gen: v6e
topology: v6e:2x2x1
jax: 0.10.0
libtpu: 0.0.40
codegen_flags: <defaults>
</compile_context>

<pallas_src>
import functools

import jax
import jax.numpy as jnp
from jax.experimental import pallas as pl
from jax.experimental.pallas import tpu as pltpu


def _value_net_kernel(x_ref, w1_ref, b1_ref, w2_ref, b2_ref, w3_ref, b3_ref,
                      out_ref):
    """Fused 3-layer MLP on one (TB, in_dims) row-tile of the batch."""
    x = x_ref[...]
    w1 = w1_ref[...]
    if x.dtype != w1.dtype:                      # bf16 matmul path
        x = x.astype(w1.dtype)

    # fc1 + ReLU (MXU matmul, f32 accumulation; bias/ReLU in f32)
    h1 = jnp.dot(x, w1, preferred_element_type=jnp.float32)
    h1 = jnp.maximum(h1 + b1_ref[...].astype(jnp.float32), 0.0)

    # fc2 + ReLU
    w2 = w2_ref[...]
    if h1.dtype != w2.dtype:
        h1 = h1.astype(w2.dtype)
    h2 = jnp.dot(h1, w2, preferred_element_type=jnp.float32)
    h2 = jnp.maximum(h2 + b2_ref[...].astype(jnp.float32), 0.0)

    # Value head (out_features == 1): VPU multiply + XLU lane-reduction
    # instead of a 1-column MXU matmul.
    w3_row = w3_ref[...].astype(jnp.float32)     # (1, fc2)
    v = jnp.sum(h2 * w3_row, axis=-1, keepdims=True)
    v = v + b3_ref[...].astype(jnp.float32)      # (TB, 1) + (1, 1)

    out_ref[...] = v.astype(out_ref.dtype)


def _round_up(x, m):
    return ((x + m - 1) // m) * m


@functools.partial(jax.jit, static_argnames=("block_rows",))
def value_network_forward(state, w1, b1, w2, b2, w3, b3, *, block_rows=512):
    """state: (B, in_dims) -> (B, 1) float32.

    state/w1/w2 may be float32 or bfloat16 (bf16 recommended on v6e/v7x);
    accumulation, biases and the value head are always float32.
    """
    batch, in_dims = state.shape
    fc2_dims = w2.shape[1]

    # Row-tile: multiple of 8 sublanes, capped at block_rows (256-1024 range
    # is the sweet spot for pipelining large batches).
    tb = min(block_rows, _round_up(batch, 8))
    tb = max(8, _round_up(tb, 8))
    num_blocks = pl.cdiv(batch, tb)
    b_pad = num_blocks * tb
    if b_pad != batch:
        state = jnp.pad(state, ((0, b_pad - batch), (0, 0)))

    # Head weight as a (1, fc2) row for the lane-reduction; bias as (1, 1).
    w3_row = w3.reshape(1, fc2_dims).astype(jnp.float32)
    b3_row = b3.reshape(1, 1).astype(jnp.float32)

    # Weights/biases: constant index_map -> DMA'd once, VMEM-resident.
    resident = lambda shape: pl.BlockSpec(shape, lambda i: (0,) * len(shape))

    out = pl.pallas_call(
        _value_net_kernel,
        out_shape=jax.ShapeDtypeStruct((b_pad, 1), jnp.float32),
        grid=(num_blocks,),
        in_specs=[
            pl.BlockSpec((tb, in_dims), lambda i: (i, 0)),   # pipelined state tiles
            resident(w1.shape), resident(b1.shape),
            resident(w2.shape), resident(b2.shape),
            resident(w3_row.shape), resident(b3_row.shape),
        ],
        out_specs=pl.BlockSpec((tb, 1), lambda i: (i, 0)),
        compiler_params=pltpu.CompilerParams(
            # Batch tiles are independent -> v7x can shard them across its
            # two TensorCores; no-op on single-TC v5e/v6e.
            dimension_semantics=("parallel",),
        ),
    )(state, w1, b1, w2, b2, w3_row, b3_row)

    return out[:batch]


def value_network_forward_bf16(state, w1, b1, w2, b2, w3, b3, **kw):
    """v6e/v7x path: bf16 storage/matmul for the two hidden layers."""
    return value_network_forward(
        state.astype(jnp.bfloat16),
        w1.astype(jnp.bfloat16), b1,
        w2.astype(jnp.bfloat16), b2,
        w3, b3, **kw)


def init_value_network_params(key, input_dims, fc1_dims, fc2_dims):
    """Mimics torch.nn.Linear init U(-1/sqrt(fan_in), 1/sqrt(fan_in)).

    Weights stored as (in_features, out_features); biases as (1, out)."""
    def linear(k, fan_in, fan_out):
        kw, kb = jax.random.split(k)
        bound = 1.0 / jnp.sqrt(jnp.float32(fan_in))
        w = jax.random.uniform(kw, (fan_in, fan_out), jnp.float32, -bound, bound)
        b = jax.random.uniform(kb, (1, fan_out), jnp.float32, -bound, bound)
        return w, b

    k1, k2, k3 = jax.random.split(key, 3)
    w1, b1 = linear(k1, input_dims, fc1_dims)
    w2, b2 = linear(k2, fc1_dims, fc2_dims)
    w3, b3 = linear(k3, fc2_dims, 1)
    return w1, b1, w2, b2, w3, b3


def value_network_ref(state, w1, b1, w2, b2, w3, b3):
    """Pure-JAX f32 reference for correctness checking."""
    h1 = jnp.maximum(state @ w1 + b1, 0.0)
    h2 = jnp.maximum(h1 @ w2 + b2, 0.0)
    return h2 @ w3 + b3


# TODO(synk): the PyTorch module's Adam optimizer and checkpoint save/load are
# training/IO concerns with no Pallas equivalent; only forward() is implemented.


if __name__ == "__main__":
    # Module-consistent small shapes: input_dims=(16,), fc1_dims=32, fc2_dims=32
    input_dims = 16
    fc1_dims = 32
    fc2_dims = 32

    key = jax.random.PRNGKey(0)
    k_state, k_params, k_state2 = jax.random.split(key, 3)
    params = init_value_network_params(k_params, input_dims, fc1_dims, fc2_dims)

    # --- Case 1: small batch (single grid step), f32, tight tolerance ------
    batch = 8
    state = jax.random.normal(k_state, (batch, input_dims), dtype=jnp.float32)
    v = value_network_forward(state, *params)
    jax.block_until_ready(v)
    v_ref = value_network_ref(state, *params)
    assert v.shape == (batch, 1), v.shape
    assert jnp.allclose(v, v_ref, atol=1e-5, rtol=1e-5), "f32 mismatch vs reference"

    # --- Case 2: multi-tile grid with a ragged tail (exercises padding) ----
    batch2 = 300
    state2 = jax.random.normal(k_state2, (batch2, input_dims), dtype=jnp.float32)
    v2 = value_network_forward(state2, *params, block_rows=128)   # grid=(3,), padded to 384
    jax.block_until_ready(v2)
    v2_ref = value_network_ref(state2, *params)
    assert v2.shape == (batch2, 1), v2.shape
    assert jnp.allclose(v2, v2_ref, atol=1e-5, rtol=1e-5), "tiled f32 mismatch vs reference"

    # --- Case 3: bf16 hidden-layer matmuls (v6e/v7x fast path) -------------
    v_bf16 = value_network_forward_bf16(state2, *params, block_rows=128)
    jax.block_until_ready(v_bf16)
    assert v_bf16.shape == (batch2, 1), v_bf16.shape
    assert jnp.allclose(v_bf16, v2_ref, atol=1e-1, rtol=1e-1), "bf16 path diverged"

    print("KERNEL_OK")
</pallas_src>

<mosaic_0001>
module attributes {stable_mosaic.version = 11 : i64} {
  func.func @_value_net_kernel(%arg0: i32, %arg1: memref<8x16xf32, #tpu.memory_space<vmem>>, %arg2: memref<16x32xf32, #tpu.memory_space<vmem>>, %arg3: memref<1x32xf32, #tpu.memory_space<vmem>>, %arg4: memref<32x32xf32, #tpu.memory_space<vmem>>, %arg5: memref<1x32xf32, #tpu.memory_space<vmem>>, %arg6: memref<1x32xf32, #tpu.memory_space<vmem>>, %arg7: memref<1x1xf32, #tpu.memory_space<vmem>>, %arg8: memref<8x1xf32, #tpu.memory_space<vmem>>) attributes {dimension_semantics = [#tpu.dimension_semantics<parallel>], iteration_bounds = array<i64: 1>, scalar_prefetch = 0 : i64, scratch_operands = 0 : i64, tpu.core_type = #tpu.core_type<tc>, window_params = [{transform_indices = @transform_0, window_bounds = array<i64: 8, 16>}, {pipeline_mode = #tpu.pipeline_mode<synchronous>, transform_indices = @transform_1, window_bounds = array<i64: 16, 32>}, {pipeline_mode = #tpu.pipeline_mode<synchronous>, transform_indices = @transform_2, window_bounds = array<i64: 1, 32>}, {pipeline_mode = #tpu.pipeline_mode<synchronous>, transform_indices = @transform_3, window_bounds = array<i64: 32, 32>}, {pipeline_mode = #tpu.pipeline_mode<synchronous>, transform_indices = @transform_4, window_bounds = array<i64: 1, 32>}, {pipeline_mode = #tpu.pipeline_mode<synchronous>, transform_indices = @transform_5, window_bounds = array<i64: 1, 32>}, {pipeline_mode = #tpu.pipeline_mode<synchronous>, transform_indices = @transform_6, window_bounds = array<i64: 1, 1>}, {transform_indices = @transform_7, window_bounds = array<i64: 8, 1>}]} {
    %c0 = arith.constant 0 : index
    %c0_0 = arith.constant 0 : index
    %0 = vector.load %arg1[%c0, %c0_0] : memref<8x16xf32, #tpu.memory_space<vmem>>, vector<8x16xf32>
    %c0_1 = arith.constant 0 : index
    %c0_2 = arith.constant 0 : index
    %1 = vector.load %arg2[%c0_1, %c0_2] : memref<16x32xf32, #tpu.memory_space<vmem>>, vector<16x32xf32>
    %cst = arith.constant dense<0.000000e+00> : vector<8x32xf32>
    %2 = tpu.matmul %0, %1, %cst {dimension_numbers = #tpu.dot_dimension_numbers<[1], [0], [0], [1], [0, 0, 1, 1], [], []>} : vector<8x16xf32>, vector<16x32xf32>, vector<8x32xf32> -> vector<8x32xf32>
    %c0_3 = arith.constant 0 : index
    %c0_4 = arith.constant 0 : index
    %3 = vector.load %arg3[%c0_3, %c0_4] : memref<1x32xf32, #tpu.memory_space<vmem>>, vector<1x32xf32>
    %4 = vector.broadcast %3 : vector<1x32xf32> to vector<8x32xf32>
    %5 = arith.addf %2, %4 : vector<8x32xf32>
    %cst_5 = arith.constant 0.000000e+00 : f32
    %6 = vector.broadcast %cst_5 : f32 to vector<8x32xf32>
    %7 = arith.maximumf %5, %6 : vector<8x32xf32>
    %c0_6 = arith.constant 0 : index
    %c0_7 = arith.constant 0 : index
    %8 = vector.load %arg4[%c0_6, %c0_7] : memref<32x32xf32, #tpu.memory_space<vmem>>, vector<32x32xf32>
    %cst_8 = arith.constant dense<0.000000e+00> : vector<8x32xf32>
    %9 = tpu.matmul %7, %8, %cst_8 {dimension_numbers = #tpu.dot_dimension_numbers<[1], [0], [0], [1], [0, 0, 1, 1], [], []>} : vector<8x32xf32>, vector<32x32xf32>, vector<8x32xf32> -> vector<8x32xf32>
    %c0_9 = arith.constant 0 : index
    %c0_10 = arith.constant 0 : index
    %10 = vector.load %arg5[%c0_9, %c0_10] : memref<1x32xf32, #tpu.memory_space<vmem>>, vector<1x32xf32>
    %11 = vector.broadcast %10 : vector<1x32xf32> to vector<8x32xf32>
    %12 = arith.addf %9, %11 : vector<8x32xf32>
    %cst_11 = arith.constant 0.000000e+00 : f32
    %13 = vector.broadcast %cst_11 : f32 to vector<8x32xf32>
    %14 = arith.maximumf %12, %13 : vector<8x32xf32>
    %c0_12 = arith.constant 0 : index
    %c0_13 = arith.constant 0 : index
    %15 = vector.load %arg6[%c0_12, %c0_13] : memref<1x32xf32, #tpu.memory_space<vmem>>, vector<1x32xf32>
    %16 = vector.broadcast %15 : vector<1x32xf32> to vector<8x32xf32>
    %17 = arith.mulf %14, %16 : vector<8x32xf32>
    %cst_14 = arith.constant dense<0.000000e+00> : vector<8xf32>
    %18 = vector.multi_reduction <add>, %17, %cst_14 [1] : vector<8x32xf32> to vector<8xf32>
    %19 = vector.shape_cast %18 : vector<8xf32> to vector<8x1xf32>
    %c0_15 = arith.constant 0 : index
    %c0_16 = arith.constant 0 : index
    %20 = vector.load %arg7[%c0_15, %c0_16] : memref<1x1xf32, #tpu.memory_space<vmem>>, vector<1x1xf32>
    %21 = vector.broadcast %20 : vector<1x1xf32> to vector<8x1xf32>
    %22 = arith.addf %19, %21 : vector<8x1xf32>
    %c0_17 = arith.constant 0 : index
    %c0_18 = arith.constant 0 : index
    %23 = vector.load %arg8[%c0_17, %c0_18] : memref<8x1xf32, #tpu.memory_space<vmem>>, vector<8x1xf32>
    tpu.vector_store %arg8[%c0_17, %c0_18], %22 {strides = array<i32>} : memref<8x1xf32, #tpu.memory_space<vmem>>, vector<8x1xf32>,
    return
  }
  func.func @transform_0(%arg0: i32) -> (i32, i32) {
    %c0_i32 = arith.constant 0 : i32
    %c0_i32_0 = arith.constant 0 : i32
    return %arg0, %c0_i32 : i32, i32
  }
  func.func @transform_1(%arg0: i32) -> (i32, i32) {
    %c0_i32 = arith.constant 0 : i32
    %c0_i32_0 = arith.constant 0 : i32
    %c0_i32_1 = arith.constant 0 : i32
    return %c0_i32, %c0_i32_0 : i32, i32
  }
  func.func @transform_2(%arg0: i32) -> (i32, i32) {
    %c0_i32 = arith.constant 0 : i32
    %c0_i32_0 = arith.constant 0 : i32
    %c0_i32_1 = arith.constant 0 : i32
    return %c0_i32, %c0_i32_0 : i32, i32
  }
  func.func @transform_3(%arg0: i32) -> (i32, i32) {
    %c0_i32 = arith.constant 0 : i32
    %c0_i32_0 = arith.constant 0 : i32
    %c0_i32_1 = arith.constant 0 : i32
    return %c0_i32, %c0_i32_0 : i32, i32
  }
  func.func @transform_4(%arg0: i32) -> (i32, i32) {
    %c0_i32 = arith.constant 0 : i32
    %c0_i32_0 = arith.constant 0 : i32
    %c0_i32_1 = arith.constant 0 : i32
    return %c0_i32, %c0_i32_0 : i32, i32
  }
  func.func @transform_5(%arg0: i32) -> (i32, i32) {
    %c0_i32 = arith.constant 0 : i32
    %c0_i32_0 = arith.constant 0 : i32
    %c0_i32_1 = arith.constant 0 : i32
    return %c0_i32, %c0_i32_0 : i32, i32
  }
  func.func @transform_6(%arg0: i32) -> (i32, i32) {
    %c0_i32 = arith.constant 0 : i32
    %c0_i32_0 = arith.constant 0 : i32
    %c0_i32_1 = arith.constant 0 : i32
    return %c0_i32, %c0_i32_0 : i32, i32
  }
  func.func @transform_7(%arg0: i32) -> (i32, i32) {
    %c0_i32 = arith.constant 0 : i32
    %c0_i32_0 = arith.constant 0 : i32
    return %arg0, %c0_i32 : i32, i32
  }
}

</mosaic_0001>

<llo_original>
// kernel: value_network_forward.1
$region0: #{value_network_forward.1}
  #allocation0 [shape = 'u32[]', space=smem, size = 0x4, offset = 0x4, fixed_abs, tag = 'smem constant byte address 0x4 - core index']
  #allocation1 [shape = 'u32[144,128]{1,0:T(1,128)}', space=vmem, size = 0x12000, scoped, tag = 'internal scratch']
  #allocation2 [shape = 'f32[1,1]{1,0:T(1,128)S(1)}', space=vmem, size = 0x200, scoped, tag = 'scoped memory for value_network_forward.1']
  %s0 = inlined_call_operand.hbm [shape: f32[8,16], index: 0, kind: input, shape index: {}]
  %s1 = inlined_call_operand.hbm [shape: f32[16,32], index: 1, kind: input, shape index: {}]
  %s2 = inlined_call_operand.vmem [shape: f32[1,32], index: 2, kind: input, shape index: {}]
  %s3 = inlined_call_operand.hbm [shape: f32[32,32], index: 3, kind: input, shape index: {}]
  %s4 = inlined_call_operand.vmem [shape: f32[1,32], index: 4, kind: input, shape index: {}]
  %s5 = inlined_call_operand.vmem [shape: f32[1,32], index: 5, kind: input, shape index: {}]
  %s6 = inlined_call_operand.<no memory space> [shape: f32[1,1], index: 6, kind: input, shape index: {}]
  %s7 = inlined_call_operand.vmem [shape: f32[8,1], index: 7, kind: output, shape index: {}]
  %s8 = sld [smem:[#allocation0]]
  $region50: #{value_network_forward.1} parent=0
    _
  %s10 = ssub.s32 1, %s8
  %s11 = scalar_select 0, %s10, %s8
  %v12 = vstv %s6
  %13 = vst [vmem:[#allocation2] sm:$0x1] %v12
  $region1: #{value_network_forward.1} parent=0
    #allocation3 [shape = 'u8[4096]{0}', space=vmem, size = 0x1000, scoped, tag = 'input window, operand 0, single buffered']
    #allocation4 [shape = 's32[1]{0}', space=sflag, size = 0x4, scoped, tag = 'scoped memory for value_network_forward.1']
    #allocation5 [shape = 'u8[8192]{0}', space=vmem, size = 0x2000, scoped, tag = 'input window, operand 1, single buffered']
    #allocation6 [shape = 's32[1]{0}', space=sflag, size = 0x4, scoped, tag = 'scoped memory for value_network_forward.1']
    #allocation7 [shape = 'u8[16384]{0}', space=vmem, size = 0x4000, scoped, tag = 'input window, operand 3, single buffered']
    %14 = vsyncpa [#allocation4], 0
    %15 = vsyncpa [#allocation6], 0
    // Predicated region
    $region2: #{value_network_forward.1} parent=1 // pred_check
      _
    $region3: #{value_network_forward.1} parent=1 // pred_check_branch
      %17 = sbr.rel (0) target = $region5
    $region4: #{value_network_forward.1} parent=1 // pred_region
      %s19 = ssub.s32 128, 128
      %20 = vsyncadd [#allocation4], %s19
      %s22 = sshll.u32 [#allocation3], 4
      %s23 = int_to_ptr.vmem [resolvable:$true] %s22
      %25 = dma.hbm_to_vmem [thread:$0]  %s0, 128, %s23, [#allocation4]
    $region5: #{value_network_forward.1} parent=1 // pred_fallthru
      _
    // Predicated region
    $region6: #{value_network_forward.1} parent=1 // pred_check
      _
    $region7: #{value_network_forward.1} parent=1 // pred_check_branch
      %27 = sbr.rel (0) target = $region9
    $region8: #{value_network_forward.1} parent=1 // pred_region
      %s29 = ssub.s32 256, 256
      %30 = vsyncadd [#allocation6], %s29
      %s31 = sshll.u32 [#allocation5], 4
      %s32 = int_to_ptr.vmem [resolvable:$true] %s31
      %37 = dma.hbm_to_vmem [thread:$0]  %s1, 256, %s32, [#allocation6], 128, 128, 8
    $region9: #{value_network_forward.1} parent=1 // pred_fallthru
      _
    // Predicated region
    $region10: #{value_network_forward.1} parent=1 // pred_check
      _
    $region11: #{value_network_forward.1} parent=1 // pred_check_branch
      %39 = sbr.rel (0) target = $region13
    $region12: #{value_network_forward.1} parent=1 // pred_region
      _
    $region13: #{value_network_forward.1} parent=1 // pred_fallthru
      _
    // Predicated region
    $region14: #{value_network_forward.1} parent=1 // pred_check
      _
    $region15: #{value_network_forward.1} parent=1 // pred_check_branch
      %41 = sbr.rel (0) target = $region17
    $region16: #{value_network_forward.1} parent=1 // pred_region
      %s43 = ssub.s32 512, 512
      %44 = vsyncadd [#allocation6], %s43
      %s45 = sshll.u32 [#allocation7], 4
      %s46 = int_to_ptr.vmem [resolvable:$true] %s45
      %51 = dma.hbm_to_vmem [thread:$0]  %s3, 512, %s46, [#allocation6], 128, 128, 8
    $region17: #{value_network_forward.1} parent=1 // pred_fallthru
      _
    // Predicated region
    $region18: #{value_network_forward.1} parent=1 // pred_check
      _
    $region19: #{value_network_forward.1} parent=1 // pred_check_branch
      %53 = sbr.rel (0) target = $region21
    $region20: #{value_network_forward.1} parent=1 // pred_region
      _
    $region21: #{value_network_forward.1} parent=1 // pred_fallthru
      _
    // Predicated region
    $region22: #{value_network_forward.1} parent=1 // pred_check
      _
    $region23: #{value_network_forward.1} parent=1 // pred_check_branch
      %55 = sbr.rel (0) target = $region25
    $region24: #{value_network_forward.1} parent=1 // pred_region
      _
    $region25: #{value_network_forward.1} parent=1 // pred_fallthru
      _
    // Predicated region
    $region26: #{value_network_forward.1} parent=1 // pred_check
      _
    $region27: #{value_network_forward.1} parent=1 // pred_check_branch
      %57 = sbr.rel (0) target = $region29
    $region28: #{value_network_forward.1} parent=1 // pred_region
      _
    $region29: #{value_network_forward.1} parent=1 // pred_fallthru
      _
    // Predicated region
    $region30: #{value_network_forward.1} parent=1 // pred_check
      _
    $region31: #{value_network_forward.1} parent=1 // pred_check_branch
      %59 = sbr.rel (0) target = $region33
    $region32: #{value_network_forward.1} parent=1 // pred_region
      %60 = dma.done [#allocation4], 128
    $region33: #{value_network_forward.1} parent=1 // pred_fallthru
      _
    // Predicated region
    $region34: #{value_network_forward.1} parent=1 // pred_check
      _
    $region35: #{value_network_forward.1} parent=1 // pred_check_branch
      %62 = sbr.rel (0) target = $region37
    $region36: #{value_network_forward.1} parent=1 // pred_region
      %63 = dma.done [#allocation6], 256
    $region37: #{value_network_forward.1} parent=1 // pred_fallthru
      _
    // Predicated region
    $region38: #{value_network_forward.1} parent=1 // pred_check
      _
    $region39: #{value_network_forward.1} parent=1 // pred_check_branch
      %65 = sbr.rel (0) target = $region41
    $region40: #{value_network_forward.1} parent=1 // pred_region
      %66 = dma.done [#allocation6], 512
    $region41: #{value_network_forward.1} parent=1 // pred_fallthru
      _
    %v67 = vld [vmem:[#allocation3] sm:$0xff]
    %v68 = vld [vmem:[#allocation5] sm:$0xff]
    %v69 = vld [vmem:[#allocation5 + $0x8] sm:$0xff]
    %v70 = vld [vmem:[%s2] sm:$0x1]
    %v72 = vlaneseq
    %v73 = vshrl.u32 %v72, 7
    %v74 = vsub.s32 0, %v73
    %v75 = vrot.slane %v70, %v74
    %vm77 = vcmask 130048
    %v79 = vsel %vm77, %v67, 0
    %81 = vmatprep.subr.mxu0 0.0
    %82 = vmatpush1.msra.mxu0 0.0
    %83 = vmatprep.subr.mxu0 0.0
    %84 = vmatpush1.msra.mxu0 0.0
    %85 = vmatprep.subr.mxu0 0.0
    %86 = vmatpush1.msra.mxu0 0.0
    %87 = vmatprep.subr.mxu0 0.0
    %88 = vmatpush1.msra.mxu0 0.0
    %89 = vmatprep.subr.mxu0 0.0
    %90 = vmatpush1.msra.mxu0 0.0
    %91 = vmatprep.subr.mxu0 0.0
    %92 = vmatpush1.msra.mxu0 0.0
    %93 = vmatprep.subr.mxu0 0.0
    %94 = vmatpush1.msra.mxu0 0.0
    %95 = vmatprep.subr.mxu0 0.0
    %96 = vmatpush1.msra.mxu0 0.0
    %97 = vmatprep.subr.mxu0 0.0
    %98 = vmatpush1.msra.mxu0 0.0
    %99 = vmatprep.subr.mxu0 0.0
    %100 = vmatpush1.msra.mxu0 0.0
    %101 = vmatprep.subr.mxu0 0.0
    %102 = vmatpush1.msra.mxu0 0.0
    %103 = vmatprep.subr.mxu0 0.0
    %104 = vmatpush1.msra.mxu0 0.0
    %105 = vmatprep.subr.mxu0 0.0
    %106 = vmatpush1.msra.mxu0 0.0
    %107 = vmatprep.subr.mxu0 0.0
    %108 = vmatpush1.msra.mxu0 0.0
    %109 = vmatprep.subr.mxu0 0.0
    %110 = vmatpush1.msra.mxu0 %v69
    %111 = vmatprep.subr.mxu0 0.0
    %112 = vmatpush1.msra.mxu0 %v68
    %113 = vmatprep.subr.mxu0 0.0
    %114 = vmatpush2.msra.mxu0 0.0
    %115 = vmatprep.subr.mxu0 0.0
    %116 = vmatpush2.msra.mxu0 0.0
    %117 = vmatprep.subr.mxu0 0.0
    %118 = vmatpush2.msra.mxu0 0.0
    %119 = vmatprep.subr.mxu0 0.0
    %120 = vmatpush2.msra.mxu0 0.0
    %121 = vmatprep.subr.mxu0 0.0
    %122 = vmatpush2.msra.mxu0 0.0
    %123 = vmatprep.subr.mxu0 0.0
    %124 = vmatpush2.msra.mxu0 0.0
    %125 = vmatprep.subr.mxu0 0.0
    %126 = vmatpush2.msra.mxu0 0.0
    %127 = vmatprep.subr.mxu0 0.0
    %128 = vmatpush2.msra.mxu0 0.0
    %129 = vmatprep.subr.mxu0 0.0
    %130 = vmatpush2.msra.mxu0 0.0
    %131 = vmatprep.subr.mxu0 0.0
    %132 = vmatpush2.msra.mxu0 0.0
    %133 = vmatprep.subr.mxu0 0.0
    %134 = vmatpush2.msra.mxu0 0.0
    %135 = vmatprep.subr.mxu0 0.0
    %136 = vmatpush2.msra.mxu0 0.0
    %137 = vmatprep.subr.mxu0 0.0
    %138 = vmatpush2.msra.mxu0 0.0
    %139 = vmatprep.subr.mxu0 0.0
    %140 = vmatpush2.msra.mxu0 0.0
    %141 = vmatprep.subr.mxu0 0.0
    %142 = vmatpush2.msra.mxu0 0.0
    %143 = vmatprep.subr.mxu0 0.0
    %144 = vmatpush2.msra.mxu0 0.0
    %145 = vmatprep.mubr.f32.mxu0 0.0
    %146 = vmatmul.mubr.f32.gmra.mxu0 %v79
    %v147 = vpop.f32.mrf.mxu0
    %v148 = vadd.f32 %v75, %v147
    %v149 = vpop.f32.mrf.mxu0
    %150 = vdwg.mxu0
    %v151 = vmax.f32 %v148, 0.0
    %v152 = vld [vmem:[#allocation7] sm:$0xff]
    %v153 = vld [vmem:[#allocation7 + $0x8] sm:$0xff]
    %v154 = vld [vmem:[#allocation7 + $0x10] sm:$0xff]
    %v155 = vld [vmem:[#allocation7 + $0x18] sm:$0xff]
    %v156 = vld [vmem:[%s4] sm:$0x1]
    %v158 = vlaneseq
    %v159 = vshrl.u32 %v158, 7
    %v160 = vsub.s32 0, %v159
    %v161 = vrot.slane %v156, %v160
    %vm163 = vcmask 261120
    %v165 = vsel %vm163, %v151, 0
    %167 = vmatprep.subr.mxu0 0.0
    %168 = vmatpush1.msra.mxu0 0.0
    %169 = vmatprep.subr.mxu0 0.0
    %170 = vmatpush1.msra.mxu0 0.0
    %171 = vmatprep.subr.mxu0 0.0
    %172 = vmatpush1.msra.mxu0 0.0
    %173 = vmatprep.subr.mxu0 0.0
    %174 = vmatpush1.msra.mxu0 0.0
    %175 = vmatprep.subr.mxu0 0.0
    %176 = vmatpush1.msra.mxu0 0.0
    %177 = vmatprep.subr.mxu0 0.0
    %178 = vmatpush1.msra.mxu0 0.0
    %179 = vmatprep.subr.mxu0 0.0
    %180 = vmatpush1.msra.mxu0 0.0
    %181 = vmatprep.subr.mxu0 0.0
    %182 = vmatpush1.msra.mxu0 0.0
    %183 = vmatprep.subr.mxu0 0.0
    %184 = vmatpush1.msra.mxu0 0.0
    %185 = vmatprep.subr.mxu0 0.0
    %186 = vmatpush1.msra.mxu0 0.0
    %187 = vmatprep.subr.mxu0 0.0
    %188 = vmatpush1.msra.mxu0 0.0
    %189 = vmatprep.subr.mxu0 0.0
    %190 = vmatpush1.msra.mxu0 0.0
    %191 = vmatprep.subr.mxu0 0.0
    %192 = vmatpush1.msra.mxu0 %v155
    %193 = vmatprep.subr.mxu0 0.0
    %194 = vmatpush1.msra.mxu0 %v154
    %195 = vmatprep.subr.mxu0 0.0
    %196 = vmatpush1.msra.mxu0 %v153
    %197 = vmatprep.subr.mxu0 0.0
    %198 = vmatpush1.msra.mxu0 %v152
    %199 = vmatprep.subr.mxu0 0.0
    %200 = vmatpush2.msra.mxu0 0.0
    %201 = vmatprep.subr.mxu0 0.0
    %202 = vmatpush2.msra.mxu0 0.0
    %203 = vmatprep.subr.mxu0 0.0
    %204 = vmatpush2.msra.mxu0 0.0
    %205 = vmatprep.subr.mxu0 0.0
    %206 = vmatpush2.msra.mxu0 0.0
    %207 = vmatprep.subr.mxu0 0.0
    %208 = vmatpush2.msra.mxu0 0.0
    %209 = vmatprep.subr.mxu0 0.0
    %210 = vmatpush2.msra.mxu0 0.0
    %211 = vmatprep.subr.mxu0 0.0
    %212 = vmatpush2.msra.mxu0 0.0
    %213 = vmatprep.subr.mxu0 0.0
    %214 = vmatpush2.msra.mxu0 0.0
    %215 = vmatprep.subr.mxu0 0.0
    %216 = vmatpush2.msra.mxu0 0.0
    %217 = vmatprep.subr.mxu0 0.0
    %218 = vmatpush2.msra.mxu0 0.0
    %219 = vmatprep.subr.mxu0 0.0
    %220 = vmatpush2.msra.mxu0 0.0
    %221 = vmatprep.subr.mxu0 0.0
    %222 = vmatpush2.msra.mxu0 0.0
    %223 = vmatprep.subr.mxu0 0.0
    %224 = vmatpush2.msra.mxu0 0.0
    %225 = vmatprep.subr.mxu0 0.0
    %226 = vmatpush2.msra.mxu0 0.0
    %227 = vmatprep.subr.mxu0 0.0
    %228 = vmatpush2.msra.mxu0 0.0
    %229 = vmatprep.subr.mxu0 0.0
    %230 = vmatpush2.msra.mxu0 0.0
    %231 = vmatprep.mubr.f32.mxu0 0.0
    %232 = vmatmul.mubr.f32.gmra.mxu0 %v165
    %v233 = vpop.f32.mrf.mxu0
    %v234 = vadd.f32 %v161, %v233
    %v235 = vpop.f32.mrf.mxu0
    %236 = vdwg.mxu0
    %v237 = vmax.f32 %v234, 0.0
    %v238 = vld [vmem:[%s5] sm:$0x1]
    %v240 = vlaneseq
    %v241 = vshrl.u32 %v240, 7
    %v242 = vsub.s32 0, %v241
    %v243 = vrot.slane %v238, %v242
    %v245 = vmul.f32 %v237, %v243
    %v246 = vsel %vm163, %v245, 0.0
    %247 = vadd.xlane.f32.xlu0 %v246
    %v248 = vpop.xlane.xlu0 %247
    %v249 = vld [vmem:[#allocation2] sm:$0x1]
    %v251 = vlaneseq
    %v252 = vshrl.u32 %v251, 7
    %v253 = vsub.s32 0, %v252
    %v254 = vrot.slane %v249, %v253
    %v256 = vadd.f32 %v248, %v254
    %vm257 = vcmask 7168
    %258 = vst.msk [vmem:[%s7] sm:$0xff] %vm257, %v256
    // Predicated region
    $region42: #{value_network_forward.1} parent=1 // pred_check
      _
    $region43: #{value_network_forward.1} parent=1 // pred_check_branch
      %260 = sbr.rel (0) target = $region45
    $region44: #{value_network_forward.1} parent=1 // pred_region
      _
    $region45: #{value_network_forward.1} parent=1 // pred_fallthru
      _
    // Predicated region
    $region46: #{value_network_forward.1} parent=1 // pred_check
      _
    $region47: #{value_network_forward.1} parent=1 // pred_check_branch
      %262 = sbr.rel (0) target = $region49
    $region48: #{value_network_forward.1} parent=1 // pred_region
      _
    $region49: #{value_network_forward.1} parent=1 // pred_fallthru
      _
    %263 = vsyncpa [#allocation4], 1
    %264 = vsyncpa [#allocation6], 1

</llo_original>
